<compile_context>
chip_gen: v6e
topology: v6e:2x2x1
jax: 0.10.0
libtpu: 0.0.40
codegen_flags: <defaults>
</compile_context>

<pallas_src>
import jax
import jax.numpy as jnp
from jax.experimental import pallas as pl
from jax.experimental.pallas import tpu as pltpu

MATMUL_DTYPE = jnp.bfloat16   # MXU operand dtype; accumulation / elementwise stay f32


def _round_up(x, m):
    return ((x + m - 1) // m) * m


def _pad_axis(x, axis, target):
    pad = target - x.shape[axis]
    if pad <= 0:
        return x
    widths = [(0, 0)] * x.ndim
    widths[axis] = (0, pad)
    return jnp.pad(x, widths)


def _maybe_vmem_limit(est_bytes):
    # Only override Mosaic's scoped-VMEM default when our (generous, x2
    # double-buffered) estimate might not fit the most conservative default.
    if est_bytes > 12 * 1024 * 1024:
        return int(est_bytes * 1.25)
    return None


# ---------------------------------------------------------------------------
# Tiled dense kernel:  (N, K) @ (K, Vp) + (1, Vp)   (hoisted GRU input
# projections, decoder context projection, and the logits layer)
# ---------------------------------------------------------------------------
def _dense_kernel(x_ref, w_ref, b_ref, o_ref):
    o_ref[...] = (jnp.dot(x_ref[...], w_ref[...],
                          preferred_element_type=jnp.float32) + b_ref[...])


def dense(x2d, w, b):
    """x2d: (N, K); w: (K, Vp) pre-padded so Vp % 128 == 0; b: (1, Vp).
    Returns (N, Vp) float32."""
    N, K = x2d.shape
    Vp = w.shape[-1]
    assert Vp % 128 == 0, "dense() expects a pre-padded, lane-aligned output dim"

    Np = _round_up(N, 8)
    if Np > 512:                       # big problems: 256-row tiles
        Np = _round_up(Np, 256)
        tm = 256
    else:                              # small problems: single row tile
        tm = Np
    tn = 512 if Vp % 512 == 0 else (256 if Vp % 256 == 0 else 128)

    xp = _pad_axis(x2d, 0, Np).astype(MATMUL_DTYPE)
    wp = w.astype(MATMUL_DTYPE)
    bp = b.astype(jnp.float32)

    # TODO(synk): K (contraction) is not tiled - fine for E/Hp-sized K here.
    est = 2 * ((tm * K + K * tn) * 2 + (tm * tn + tn) * 4)
    out = pl.pallas_call(
        _dense_kernel,
        out_shape=jax.ShapeDtypeStruct((Np, Vp), jnp.float32),
        grid=(Np // tm, Vp // tn),
        in_specs=[
            pl.BlockSpec((tm, K), lambda i, j: (i, 0)),
            pl.BlockSpec((K, tn), lambda i, j: (0, j)),
            pl.BlockSpec((1, tn), lambda i, j: (0, j)),
        ],
        out_specs=pl.BlockSpec((tm, tn), lambda i, j: (i, j)),
        compiler_params=pltpu.CompilerParams(
            dimension_semantics=("parallel", "parallel"),
            vmem_limit_bytes=_maybe_vmem_limit(est)),
    )(xp, wp, bp)
    return out[:N]


# ---------------------------------------------------------------------------
# Fused multi-layer GRU stack kernel.
# Grid = (batch groups [parallel], time chunks [arbitrary]); per-layer hidden
# state is carried across chunks in VMEM scratch; gate inputs / outputs are
# sliced per step from refs inside a lax.fori_loop.
# ---------------------------------------------------------------------------
def _make_gru_stack_kernel(L, Tc, Bg, Hp, multi, has_ctx):
    H3 = 3 * Hp
    cdt = MATMUL_DTYPE

    def kernel(*refs):
        i = 0
        gic_ref = None
        if has_ctx:
            gic_ref = refs[i]; i += 1
        gi0_ref, h0_ref = refs[i], refs[i + 1]; i += 2
        wih_ref = bih_ref = None
        if multi:
            wih_ref, bih_ref = refs[i], refs[i + 1]; i += 2
        whh_ref, bhn_ref = refs[i], refs[i + 1]; i += 2
        out_ref, state_ref = refs[i], refs[i + 1]; i += 2
        h_scr = refs[i]; i += 1
        x_scr = gi_scr = None
        if multi:
            x_scr, gi_scr = refs[i], refs[i + 1]

        c = pl.program_id(1)

        @pl.when(c == 0)
        def _():
            # (re)initialise the per-layer carry at the first chunk of each group
            h_scr[...] = h0_ref[...]

        # time-invariant decoder-context gates, added per step for layer 0
        gic = gic_ref[...] if has_ctx else None          # (Bg, 3Hp)

        for l in range(L):
            last = (l == L - 1)

            if l > 0:
                # Hoisted input projection for the whole chunk: one MXU matmul
                # (bf16 operands, f32 accumulation), written to VMEM scratch and
                # sliced per step (never held live across the time loop).
                gi_scr[...] = (jnp.dot(x_scr[...].astype(cdt), wih_ref[l - 1],
                                       preferred_element_type=jnp.float32)
                               + bih_ref[l - 1])

            # b_hh of the n-gate cannot be folded into the input bias (it is
            # scaled by r); broadcast it once per layer, outside the time loop.
            bhn_b = jnp.broadcast_to(bhn_ref[l], (Bg, Hp))

            if l == 0:
                if has_ctx:
                    def load_gi(t):
                        return gi0_ref[t] + gic
                else:
                    def load_gi(t):
                        return gi0_ref[t]
            else:
                def load_gi(t):
                    return gi_scr[pl.ds(pl.multiple_of(t * Bg, Bg), Bg), :]

            if last:
                # last layer writes straight into the pipelined output block
                def store_h(t, h):
                    out_ref[t] = h
            else:
                def store_h(t, h):
                    x_scr[pl.ds(pl.multiple_of(t * Bg, Bg), Bg), :] = h

            def step(t, h, l=l, load_gi=load_gi, store_h=store_h, bhn_b=bhn_b):
                gi = load_gi(t)                                       # (Bg, 3Hp)
                # single fused recurrent matmul for all three gates
                gh = jnp.dot(h.astype(cdt), whh_ref[l],
                             preferred_element_type=jnp.float32)      # (Bg, 3Hp)
                r = jax.nn.sigmoid(gi[:, :Hp] + gh[:, :Hp])
                z = jax.nn.sigmoid(gi[:, Hp:2 * Hp] + gh[:, Hp:2 * Hp])
                n = jnp.tanh(gi[:, 2 * Hp:] + r * (gh[:, 2 * Hp:] + bhn_b))
                h = (1.0 - z) * n + z * h                             # PyTorch GRU update
                store_h(t, h)
                return h

            h_scr[l] = jax.lax.fori_loop(0, Tc, step, h_scr[l])

        @pl.when(c == pl.num_programs(1) - 1)
        def _():
            state_ref[...] = h_scr[...]

    return kernel


def _choose_time_chunk(T, Bg, Hp, budget_bytes=4 * 1024 * 1024):
    """Largest chunk length (dividing T) whose chunk-scaled VMEM fits the budget."""
    # gi0 chunk (x2 buffers, 3Hp) + out chunk (x2, Hp) + x_scr (Hp) + gi_scr (3Hp)
    per_step = Bg * Hp * 4 * (2 * 3 + 2 * 1 + 1 + 3)
    tc_max = max(1, budget_bytes // per_step)
    if tc_max >= T:
        return T
    best = 1
    for d in range(1, tc_max + 1):
        if T % d == 0:
            best = d
    return best


def gru_stack(gi0, gic, h0, p):
    """gi0: (T, Bp, 3Hp) layer-0 gate pre-activations (bias already folded in);
    gic: (Bp, 3Hp) time-invariant context gates or None; h0: (L, Bp, Hp).
    Returns (out (T, Bp, Hp), state (L, Bp, Hp)), both float32."""
    T, Bp, H3 = gi0.shape
    L, _, Hp = h0.shape
    assert H3 == 3 * Hp

    Bg = 8                       # one f32 sublane tile per batch group
    G = Bp // Bg
    Tc = _choose_time_chunk(T, Bg, Hp)
    C = T // Tc
    multi = L > 1
    has_ctx = gic is not None

    inputs, in_specs = [], []
    if has_ctx:
        inputs.append(gic)
        in_specs.append(pl.BlockSpec((Bg, H3), lambda g, c: (g, 0)))
    inputs += [gi0, h0]
    in_specs += [pl.BlockSpec((Tc, Bg, H3), lambda g, c: (c, g, 0)),
                 pl.BlockSpec((L, Bg, Hp), lambda g, c: (0, g, 0))]
    if multi:
        inputs += [p["wih_rest"], p["bih_rest"]]
        in_specs += [pl.BlockSpec((L - 1, Hp, H3), lambda g, c: (0, 0, 0)),
                     pl.BlockSpec((L - 1, 1, H3), lambda g, c: (0, 0, 0))]
    inputs += [p["whh"], p["bhn"]]
    in_specs += [pl.BlockSpec((L, Hp, H3), lambda g, c: (0, 0, 0)),
                 pl.BlockSpec((L, 1, Hp), lambda g, c: (0, 0, 0))]

    out_shape = (jax.ShapeDtypeStruct((T, Bp, Hp), jnp.float32),
                 jax.ShapeDtypeStruct((L, Bp, Hp), jnp.float32))
    out_specs = (pl.BlockSpec((Tc, Bg, Hp), lambda g, c: (c, g, 0)),
                 pl.BlockSpec((L, Bg, Hp), lambda g, c: (0, g, 0)))

    scratch = [pltpu.VMEM((L, Bg, Hp), jnp.float32)]          # per-layer h carry
    if multi:
        scratch += [pltpu.VMEM((Tc * Bg, Hp), jnp.float32),   # inter-layer chunk output
                    pltpu.VMEM((Tc * Bg, H3), jnp.float32)]   # hoisted gi for layers > 0

    wbytes = p["whh"].dtype.itemsize
    est = (4 * (2 * Tc * Bg * H3 + 2 * Tc * Bg * Hp + 4 * L * Bg * Hp
                + L * Bg * Hp + (Tc * Bg * (Hp + H3) if multi else 0)
                + 2 * Bg * H3)
           + 2 * wbytes * (L + max(L - 1, 0)) * Hp * H3
           + 4 * 2 * (L * Hp + L * H3))

    out, state = pl.pallas_call(
        _make_gru_stack_kernel(L, Tc, Bg, Hp, multi, has_ctx),
        out_shape=out_shape,
        grid=(G, C),
        in_specs=in_specs,
        out_specs=out_specs,
        scratch_shapes=scratch,
        compiler_params=pltpu.CompilerParams(
            dimension_semantics=("parallel", "arbitrary"),
            vmem_limit_bytes=_maybe_vmem_limit(est)),
    )(*inputs)
    return out, state


# ---------------------------------------------------------------------------
# One-time parameter packing: PyTorch-style (In,3H)/(H,3H) -> padded gate-major
# blocks (gate g occupies lanes [g*Hp, g*Hp+H)), bf16 weights, folded biases.
# ---------------------------------------------------------------------------
def _place_gates(w3h, H, Hp):
    """(..., 3H) -> (..., 3Hp) with gate g placed at columns [g*Hp, g*Hp+H)."""
    pads = [(0, 0)] * (w3h.ndim - 1)
    parts = [jnp.pad(w3h[..., g * H:(g + 1) * H], pads + [(0, Hp - H)])
             for g in range(3)]
    return jnp.concatenate(parts, axis=-1)


def _comb_input_bias(bih, bhh, H, Hp):
    """Fold b_hh of the r/z gates into the hoisted input bias (n-gate stays)."""
    bz = jnp.concatenate([bhh[:, :2 * H], jnp.zeros((1, H), bih.dtype)], axis=-1)
    return _place_gates(bih + bz, H, Hp).astype(jnp.float32)


def _pack_gru_layers(layers, H, Hp, mdt):
    """layers: list of (wih (In,3H), whh (H,3H), bih (1,3H), bhh (1,3H))."""
    L = len(layers)
    whh = jnp.stack([_pad_axis(_place_gates(w, H, Hp), 0, Hp)
                     for (_, w, _, _) in layers]).astype(mdt)            # (L,Hp,3Hp)
    bhn = jnp.stack([_pad_axis(b[:, 2 * H:3 * H], 1, Hp)
                     for (_, _, _, b) in layers]).astype(jnp.float32)    # (L,1,Hp)
    bih0 = _comb_input_bias(layers[0][2], layers[0][3], H, Hp)           # (1,3Hp)
    if L > 1:
        wih_rest = jnp.stack([_pad_axis(_place_gates(w, H, Hp), 0, Hp)
                              for (w, _, _, _) in layers[1:]]).astype(mdt)
        bih_rest = jnp.stack([_comb_input_bias(bi, bh, H, Hp)
                              for (_, _, bi, bh) in layers[1:]])
    else:
        wih_rest = bih_rest = None
    return {"whh": whh, "bhn": bhn, "bih0": bih0,
            "wih_rest": wih_rest, "bih_rest": bih_rest,
            "L": L, "H": H, "Hp": Hp}


def prepare_encoder_params(raw, mdt=MATMUL_DTYPE):
    H = raw["gru"][0][1].shape[0]
    Hp = _round_up(H, 128)
    p = _pack_gru_layers(raw["gru"], H, Hp, mdt)
    p["wih0_x"] = _place_gates(raw["gru"][0][0], H, Hp).astype(mdt)      # (E,3Hp)
    p["emb"] = raw["emb"]
    return p


def prepare_decoder_params(raw, mdt=MATMUL_DTYPE):
    H = raw["gru"][0][1].shape[0]
    Hp = _round_up(H, 128)
    p = _pack_gru_layers(raw["gru"], H, Hp, mdt)
    wih0 = raw["gru"][0][0]                                              # (E+H,3H)
    E = wih0.shape[0] - H
    p["wih0_x"] = _place_gates(wih0[:E], H, Hp).astype(mdt)              # (E,3Hp)
    p["wih0_c"] = _pad_axis(_place_gates(wih0[E:], H, Hp), 0, Hp).astype(mdt)
    p["emb"] = raw["emb"]
    V = raw["dense_w"].shape[1]
    Vp = _round_up(V, 128)
    p["dense_w"] = _pad_axis(_pad_axis(raw["dense_w"], 1, Vp), 0, Hp).astype(mdt)
    p["dense_b"] = _pad_axis(raw["dense_b"], 1, Vp).astype(jnp.float32)
    p["V"] = V
    p["zero_bias3"] = jnp.zeros((1, 3 * Hp), jnp.float32)
    return p


# ---------------------------------------------------------------------------
# Model glue (plain JAX): embedding lookup, batch padding, permutes
# ---------------------------------------------------------------------------
def encoder_forward(p, enc_X):
    H, Hp, L = p["H"], p["Hp"], p["L"]
    B = enc_X.shape[0]
    x = jnp.take(p["emb"], jnp.transpose(enc_X), axis=0)     # (T, B, E) time-major
    T, _, E = x.shape
    Bp = _round_up(B, 8)
    x = _pad_axis(x, 1, Bp)                                   # (T, Bp, E)

    # hoisted layer-0 input projection over the whole sequence (single tiled matmul)
    gi0 = dense(x.reshape(T * Bp, E), p["wih0_x"], p["bih0"]).reshape(T, Bp, 3 * Hp)
    h0 = jnp.zeros((L, Bp, Hp), jnp.float32)
    out, state = gru_stack(gi0, None, h0, p)
    return out[:, :B, :H], state[:, :B, :H]


def decoder_forward(p, dec_X, state):
    H, Hp, L = p["H"], p["Hp"], p["L"]
    B = dec_X.shape[0]
    x = jnp.take(p["emb"], jnp.transpose(dec_X), axis=0)      # (T, B, E)
    T, _, E = x.shape
    Bp = _round_up(B, 8)
    x = _pad_axis(x, 1, Bp)

    gi0 = dense(x.reshape(T * Bp, E), p["wih0_x"], p["bih0"]).reshape(T, Bp, 3 * Hp)

    state_p = _pad_axis(_pad_axis(state, 2, Hp), 1, Bp)        # (L, Bp, Hp)
    # context is time-invariant: project it ONCE; added per step inside the kernel
    gic = dense(state_p[-1], p["wih0_c"], p["zero_bias3"])     # (Bp, 3Hp)

    out, new_state = gru_stack(gi0, gic, state_p, p)

    logits = dense(out.reshape(T * Bp, Hp), p["dense_w"], p["dense_b"])
    logits = logits.reshape(T, Bp, -1)[:, :B, :p["V"]]         # (T, B, V)
    return jnp.transpose(logits, (1, 0, 2)), new_state[:, :B, :H]


def encoder_decoder_forward(enc_p, dec_p, enc_X, dec_X):
    enc_outputs = encoder_forward(enc_p, enc_X)
    dec_state = enc_outputs[1]                                 # init_state
    return decoder_forward(dec_p, dec_X, dec_state)


# ---------------------------------------------------------------------------
# Deterministic parameter init (shapes follow nn.Embedding / nn.GRU / nn.Linear)
# ---------------------------------------------------------------------------
def _uniform(key, shape, scale):
    return jax.random.uniform(key, shape, jnp.float32, -scale, scale)


def init_gru_params(key, input_size, hidden, num_layers):
    params = []
    scale = 1.0 / jnp.sqrt(hidden)
    for l in range(num_layers):
        in_sz = input_size if l == 0 else hidden
        key, k1, k2, k3, k4 = jax.random.split(key, 5)
        wih = _uniform(k1, (in_sz, 3 * hidden), scale)         # stored transposed: x @ wih
        whh = _uniform(k2, (hidden, 3 * hidden), scale)
        bih = _uniform(k3, (1, 3 * hidden), scale)
        bhh = _uniform(k4, (1, 3 * hidden), scale)
        params.append((wih, whh, bih, bhh))
    return key, params


def init_params(key, src_vocab, tgt_vocab, embed, hidden, num_layers):
    key, ke = jax.random.split(key)
    enc = {"emb": jax.random.normal(ke, (src_vocab, embed), jnp.float32)}
    key, enc["gru"] = init_gru_params(key, embed, hidden, num_layers)

    key, kd = jax.random.split(key)
    dec = {"emb": jax.random.normal(kd, (tgt_vocab, embed), jnp.float32)}
    key, dec["gru"] = init_gru_params(key, embed + hidden, hidden, num_layers)
    key, kw, kb = jax.random.split(key, 3)
    scale = 1.0 / jnp.sqrt(hidden)
    dec["dense_w"] = _uniform(kw, (hidden, tgt_vocab), scale)
    dec["dense_b"] = _uniform(kb, (1, tgt_vocab), scale)
    return enc, dec


# ---------------------------------------------------------------------------
# Pure-JAX f32 reference (lax.scan) for correctness check
# ---------------------------------------------------------------------------
def gru_layer_ref(x, h0, wih, whh, bih, bhh):
    H = h0.shape[-1]

    def step(h, xt):
        gi = xt @ wih + bih
        gh = h @ whh + bhh
        r = jax.nn.sigmoid(gi[:, :H] + gh[:, :H])
        z = jax.nn.sigmoid(gi[:, H:2 * H] + gh[:, H:2 * H])
        n = jnp.tanh(gi[:, 2 * H:] + r * gh[:, 2 * H:])
        hn = (1.0 - z) * n + z * h
        return hn, hn

    h_last, ys = jax.lax.scan(step, h0, x)
    return ys, h_last


def gru_stack_ref(x, h0_layers, layer_params):
    out = x
    finals = []
    for l, (wih, whh, bih, bhh) in enumerate(layer_params):
        out, h_last = gru_layer_ref(out, h0_layers[l], wih, whh, bih, bhh)
        finals.append(h_last)
    return out, jnp.stack(finals, axis=0)


def encoder_decoder_ref(enc_params, dec_params, enc_X, dec_X):
    emb = jnp.take(enc_params["emb"], enc_X, axis=0)
    x = jnp.transpose(emb, (1, 0, 2))
    L = len(enc_params["gru"])
    B = x.shape[1]
    H = enc_params["gru"][0][1].shape[0]
    _, state = gru_stack_ref(x, jnp.zeros((L, B, H), jnp.float32), enc_params["gru"])

    demb = jnp.take(dec_params["emb"], dec_X, axis=0)
    dx = jnp.transpose(demb, (1, 0, 2))
    T = dx.shape[0]
    ctx = jnp.broadcast_to(state[-1][None], (T,) + state[-1].shape)
    out, new_state = gru_stack_ref(jnp.concatenate([dx, ctx], 2), state, dec_params["gru"])
    logits = out @ dec_params["dense_w"] + dec_params["dense_b"]
    return jnp.transpose(logits, (1, 0, 2)), new_state


# ---------------------------------------------------------------------------
if __name__ == "__main__":
    SRC_VOCAB, TGT_VOCAB = 17, 19
    EMBED, HIDDEN, LAYERS = 8, 16, 2
    B, T_ENC, T_DEC = 2, 7, 5

    key = jax.random.PRNGKey(0)
    enc_raw, dec_raw = init_params(key, SRC_VOCAB, TGT_VOCAB, EMBED, HIDDEN, LAYERS)

    # parameters are packed / padded / bf16-cast ONCE, outside the forward path
    enc_p = prepare_encoder_params(enc_raw)
    dec_p = prepare_decoder_params(dec_raw)

    key, k1, k2 = jax.random.split(jax.random.PRNGKey(0), 3)
    enc_X = jax.random.randint(k1, (B, T_ENC), 0, SRC_VOCAB, dtype=jnp.int32)
    dec_X = jax.random.randint(k2, (B, T_DEC), 0, TGT_VOCAB, dtype=jnp.int32)

    logits, dec_state = encoder_decoder_forward(enc_p, dec_p, enc_X, dec_X)
    logits = jax.block_until_ready(logits)
    dec_state = jax.block_until_ready(dec_state)

    assert logits.shape == (B, T_DEC, TGT_VOCAB), logits.shape
    assert dec_state.shape == (LAYERS, B, HIDDEN), dec_state.shape

    ref_logits, ref_state = encoder_decoder_ref(enc_raw, dec_raw, enc_X, dec_X)
    # bf16 MXU operands (f32 accumulation) -> tolerance loosened vs the f32 reference
    assert jnp.allclose(logits, ref_logits, rtol=3e-2, atol=3e-2), \
        float(jnp.max(jnp.abs(logits - ref_logits)))
    assert jnp.allclose(dec_state, ref_state, rtol=3e-2, atol=3e-2), \
        float(jnp.max(jnp.abs(dec_state - ref_state)))

    print("KERNEL_OK")
</pallas_src>

<mosaic_0001>
module attributes {stable_mosaic.version = 11 : i64} {
  func.func @_dense_kernel(%arg0: i32, %arg1: i32, %arg2: memref<56x8xbf16, #tpu.memory_space<vmem>>, %arg3: memref<8x128xbf16, #tpu.memory_space<vmem>>, %arg4: memref<1x128xf32, #tpu.memory_space<vmem>>, %arg5: memref<56x128xf32, #tpu.memory_space<vmem>>) attributes {dimension_semantics = [#tpu.dimension_semantics<parallel>, #tpu.dimension_semantics<parallel>], iteration_bounds = array<i64: 1, 3>, scalar_prefetch = 0 : i64, scratch_operands = 0 : i64, tpu.core_type = #tpu.core_type<tc>, window_params = [{transform_indices = @transform_0, window_bounds = array<i64: 56, 8>}, {transform_indices = @transform_1, window_bounds = array<i64: 8, 128>}, {transform_indices = @transform_2, window_bounds = array<i64: 1, 128>}, {transform_indices = @transform_3, window_bounds = array<i64: 56, 128>}]} {
    %c0 = arith.constant 0 : index
    %c0_0 = arith.constant 0 : index
    %0 = vector.load %arg2[%c0, %c0_0] : memref<56x8xbf16, #tpu.memory_space<vmem>>, vector<56x8xbf16>
    %c0_1 = arith.constant 0 : index
    %c0_2 = arith.constant 0 : index
    %1 = vector.load %arg3[%c0_1, %c0_2] : memref<8x128xbf16, #tpu.memory_space<vmem>>, vector<8x128xbf16>
    %cst = arith.constant dense<0.000000e+00> : vector<56x128xf32>
    %2 = tpu.matmul %0, %1, %cst {dimension_numbers = #tpu.dot_dimension_numbers<[1], [0], [0], [1], [0, 0, 1, 1], [], []>} : vector<56x8xbf16>, vector<8x128xbf16>, vector<56x128xf32> -> vector<56x128xf32>
    %c0_3 = arith.constant 0 : index
    %c0_4 = arith.constant 0 : index
    %3 = vector.load %arg4[%c0_3, %c0_4] : memref<1x128xf32, #tpu.memory_space<vmem>>, vector<1x128xf32>
    %4 = vector.broadcast %3 : vector<1x128xf32> to vector<56x128xf32>
    %5 = arith.addf %2, %4 : vector<56x128xf32>
    %c0_5 = arith.constant 0 : index
    %c0_6 = arith.constant 0 : index
    %6 = vector.load %arg5[%c0_5, %c0_6] : memref<56x128xf32, #tpu.memory_space<vmem>>, vector<56x128xf32>
    tpu.vector_store %arg5[%c0_5, %c0_6], %5 {strides = array<i32>} : memref<56x128xf32, #tpu.memory_space<vmem>>, vector<56x128xf32>,
    return
  }
  func.func @transform_0(%arg0: i32, %arg1: i32) -> (i32, i32) {
    %c0_i32 = arith.constant 0 : i32
    %c0_i32_0 = arith.constant 0 : i32
    return %arg0, %c0_i32 : i32, i32
  }
  func.func @transform_1(%arg0: i32, %arg1: i32) -> (i32, i32) {
    %c0_i32 = arith.constant 0 : i32
    %c0_i32_0 = arith.constant 0 : i32
    return %c0_i32, %arg1 : i32, i32
  }
  func.func @transform_2(%arg0: i32, %arg1: i32) -> (i32, i32) {
    %c0_i32 = arith.constant 0 : i32
    %c0_i32_0 = arith.constant 0 : i32
    return %c0_i32, %arg1 : i32, i32
  }
  func.func @transform_3(%arg0: i32, %arg1: i32) -> (i32, i32) {
    %c0_i32 = arith.constant 0 : i32
    return %arg0, %arg1 : i32, i32
  }
}

</mosaic_0001>

<llo_original>
// kernel: tpu_custom_call.1
$region0: #{tpu_custom_call.1}
  #allocation0 [shape = 'u32[]', space=smem, size = 0x4, offset = 0x4, fixed_abs, tag = 'smem constant byte address 0x4 - core index']
  #allocation1 [shape = 'u32[144,128]{1,0:T(1,128)}', space=vmem, size = 0x12000, scoped, tag = 'internal scratch']
  %s0 = inlined_call_operand.vmem [shape: bf16[56,8], index: 0, kind: input, shape index: {}]
  %s1 = inlined_call_operand.vmem [shape: bf16[8,384], index: 1, kind: input, shape index: {}]
  %s2 = inlined_call_operand.vmem [shape: f32[1,384], index: 2, kind: input, shape index: {}]
  %s3 = inlined_call_operand.hbm [shape: f32[56,384], index: 3, kind: output, shape index: {}]
  %s4 = sld [smem:[#allocation0]]
  $region45: #{tpu_custom_call.1} parent=0
    _
  %s6 = ssub.s32 1, %s4
  %s7 = scalar_select 0, %s6, %s4
  $region1: #{tpu_custom_call.1} parent=0
    #allocation2 [shape = 'u8[57344]{0}', space=vmem, size = 0xe000, scoped, tag = 'output window, operand 0']
    #allocation3 [shape = 's32[2]{0}', space=sflag, size = 0x8, scoped, tag = 'scoped memory for tpu_custom_call.1']
    %8 = vsyncpa [#allocation3], 0
    %s9 = scalar_lea.sflag [#allocation3], 1
    %10 = vsyncpa %s9, 0
    loop: start=0, step=1, limit=5
    $region2: #{tpu_custom_call.1} parent=1 // loop_pre_header
      _
    $region3: #{tpu_custom_call.1} parent=1 // loop_header
      %s12 = sphi 0, %s16
      %p13 = scmp.ge.s32.totalorder %s12, 5
      %s19 = sphi 0, %s31
      %s20 = sphi 0, %s27
      %s21 = sphi 0, %s19
      %s22 = sphi 0, %s20
      %s23 = sphi 0, %s21
      %s24 = sphi 0, %s22
      %s34 = sphi 0, %s36
      %s37 = sphi 0, %s34
      %s38 = sphi 0, %s37
      %s54 = sphi 0, %s38
      %s60 = sphi 0, %s62
      %s63 = sphi 0, %s60
      %s64 = sphi 0, %s63
      %s80 = sphi 0, %s64
      %s86 = sphi 0, %s88
      %s89 = sphi 0, %s86
      %s90 = sphi 0, %s89
      %s106 = sphi 0, %s90
      %s114 = sphi 0, %s116
      %s117 = sphi 0, %s114
      %s118 = sphi 0, %s117
      %s134 = sphi 0, %s118
    $region4: #{tpu_custom_call.1} parent=1 // loop_header_branch
      %15 = sbr.rel (%p13) target = $region8
    $region5: #{tpu_custom_call.1} parent=1 // loop_body
      %s17 = ssub.s32 %s12, 1
      %s18 = ssub.s32 %s12, 2
      %s25 = sadd.s32 1, %s20
      %p26 = scmp.ge.s32.totalorder %s25, 3
      %s27 = scalar_select %p26, 0, %s25
      %s28 = sadd.s32 1, %s19
      %s29 = scalar_select %p26, %s28, %s19
      %p30 = scmp.ge.s32.totalorder %s29, 1
      %s31 = scalar_select %p30, 0, %s29
      %s32 = ssub.s32 %s19, %s31
      %p33 = scmp.eq.s32.totalorder %s32, 0
      %s35 = sadd.s32 %s34, 1
      %s36 = scalar_select %p33, %s34, %s35
      %p39 = pneg %p33
      %p40 = scmp.eq.s32.totalorder %s12, 2
      %p41 = por %p39, %p40
      %p42 = scmp.ne.s32.totalorder %s34, %s37
      %p43 = scmp.eq.s32.totalorder %s12, 0
      %p44 = por %p42, %p43
      %p45 = scmp.ne.s32.totalorder %s34, %s37
      %p46 = scmp.eq.s32.totalorder %s17, 2
      %p47 = por %p45, %p46
      %p48 = scmp.ne.s32.totalorder %s37, %s38
      %p49 = scmp.eq.s32.totalorder %s17, 0
      %p50 = por %p48, %p49
      %p51 = scmp.ne.s32.totalorder %s37, %s38
      %p52 = scmp.eq.s32.totalorder %s18, 2
      %p53 = por %p51, %p52
      %p55 = scmp.ne.s32.totalorder %s38, %s54
      %p56 = scmp.eq.s32.totalorder %s18, 0
      %p57 = por %p55, %p56
      %s58 = ssub.s32 %s20, %s27
      %p59 = scmp.eq.s32.totalorder %s58, 0
      %s61 = sadd.s32 %s60, 1
      %s62 = scalar_select %p59, %s60, %s61
      %p65 = pneg %p59
      %p66 = scmp.eq.s32.totalorder %s12, 2
      %p67 = por %p65, %p66
      %p68 = scmp.ne.s32.totalorder %s60, %s63
      %p69 = scmp.eq.s32.totalorder %s12, 0
      %p70 = por %p68, %p69
      %p71 = scmp.ne.s32.totalorder %s60, %s63
      %p72 = scmp.eq.s32.totalorder %s17, 2
      %p73 = por %p71, %p72
      %p74 = scmp.ne.s32.totalorder %s63, %s64
      %p75 = scmp.eq.s32.totalorder %s17, 0
      %p76 = por %p74, %p75
      %p77 = scmp.ne.s32.totalorder %s63, %s64
      %p78 = scmp.eq.s32.totalorder %s18, 2
      %p79 = por %p77, %p78
      %p81 = scmp.ne.s32.totalorder %s64, %s80
      %p82 = scmp.eq.s32.totalorder %s18, 0
      %p83 = por %p81, %p82
      %s84 = ssub.s32 %s20, %s27
      %p85 = scmp.eq.s32.totalorder %s84, 0
      %s87 = sadd.s32 %s86, 1
      %s88 = scalar_select %p85, %s86, %s87
      %p91 = pneg %p85
      %p92 = scmp.eq.s32.totalorder %s12, 2
      %p93 = por %p91, %p92
      %p94 = scmp.ne.s32.totalorder %s86, %s89
      %p95 = scmp.eq.s32.totalorder %s12, 0
      %p96 = por %p94, %p95
      %p97 = scmp.ne.s32.totalorder %s86, %s89
      %p98 = scmp.eq.s32.totalorder %s17, 2
      %p99 = por %p97, %p98
      %p100 = scmp.ne.s32.totalorder %s89, %s90
      %p101 = scmp.eq.s32.totalorder %s17, 0
      %p102 = por %p100, %p101
      %p103 = scmp.ne.s32.totalorder %s89, %s90
      %p104 = scmp.eq.s32.totalorder %s18, 2
      %p105 = por %p103, %p104
      %p107 = scmp.ne.s32.totalorder %s90, %s106
      %p108 = scmp.eq.s32.totalorder %s18, 0
      %p109 = por %p107, %p108
      %s110 = ssub.s32 %s19, %s31
      %s111 = ssub.s32 %s20, %s27
      %s112 = sor.u32 %s110, %s111
      %p113 = scmp.eq.s32.totalorder %s112, 0
      %s115 = sadd.s32 %s114, 1
      %s116 = scalar_select %p113, %s114, %s115
      %p119 = pneg %p113
      %p120 = scmp.eq.s32.totalorder %s12, 2
      %p121 = por %p119, %p120
      %p122 = scmp.ne.s32.totalorder %s114, %s117
      %p123 = scmp.eq.s32.totalorder %s12, 0
      %p124 = por %p122, %p123
      %p125 = scmp.ne.s32.totalorder %s114, %s117
      %p126 = scmp.eq.s32.totalorder %s17, 2
      %p127 = por %p125, %p126
      %p128 = scmp.ne.s32.totalorder %s117, %s118
      %p129 = scmp.eq.s32.totalorder %s17, 0
      %p130 = por %p128, %p129
      %p131 = scmp.ne.s32.totalorder %s117, %s118
      %p132 = scmp.eq.s32.totalorder %s18, 2
      %p133 = por %p131, %p132
      %p135 = scmp.ne.s32.totalorder %s118, %s134
      %p136 = scmp.eq.s32.totalorder %s18, 0
      %p137 = por %p135, %p136
      %p138 = scmp.le.s32.totalorder 1, %s12
      %p139 = scmp.lt.s32.totalorder %s12, 4
      %p140 = pnand %p138, %p139
      %p141 = pneg %p140
      // Predicated region
      $region9: #{tpu_custom_call.1} parent=5 // pred_check
        _
      $region10: #{tpu_custom_call.1} parent=5 // pred_check_branch
        %143 = sbr.rel (%p140) target = $region12
      $region11: #{tpu_custom_call.1} parent=5 // pred_region
        %s144 = ssub.s32 %s12, 1
        // Predicated region
        $region13: #{tpu_custom_call.1} parent=11 // pred_check
          %p145 = pneg %p50
        $region14: #{tpu_custom_call.1} parent=11 // pred_check_branch
          %147 = sbr.rel (%p145) target = $region16
        $region15: #{tpu_custom_call.1} parent=11 // pred_region
          %s148 = smul.u32 7, %s21
          %p149 = scmp.lt.s32.totalorder %s148, 6
          %s150 = scalar_select %p149, %s148, 6
          %s151 = smul.addr %s150, 4
          %s152 = scalar_lea.vmem %s0, %s151
          %s153 = smul.u32 7, %s21
        $region16: #{tpu_custom_call.1} parent=11 // pred_fallthru
          _
      $region12: #{tpu_custom_call.1} parent=5 // pred_fallthru
        _
      %p154 = scmp.lt.s32.totalorder %s12, 3
      // Predicated region
      $region17: #{tpu_custom_call.1} parent=5 // pred_check
        %p155 = pneg %p154
      $region18: #{tpu_custom_call.1} parent=5 // pred_check_branch
        %157 = sbr.rel (%p155) target = $region20
      $region19: #{tpu_custom_call.1} parent=5 // pred_region
        // Predicated region
        $region21: #{tpu_custom_call.1} parent=19 // pred_check
          %p158 = pneg %p70
        $region22: #{tpu_custom_call.1} parent=19 // pred_check_branch
          %160 = sbr.rel (%p158) target = $region24
        $region23: #{tpu_custom_call.1} parent=19 // pred_region
          %p161 = scmp.lt.s32.totalorder %s20, 2
          %s162 = scalar_select %p161, %s20, 2
          %s163 = smul.addr %s162, 4
          %s164 = scalar_lea.vmem %s1, %s163
        $region24: #{tpu_custom_call.1} parent=19 // pred_fallthru
          _
        // Predicated region
        $region25: #{tpu_custom_call.1} parent=19 // pred_check
          %p165 = pneg %p96
        $region26: #{tpu_custom_call.1} parent=19 // pred_check_branch
          %167 = sbr.rel (%p165) target = $region28
        $region27: #{tpu_custom_call.1} parent=19 // pred_region
          %p168 = scmp.lt.s32.totalorder %s20, 2
          %s169 = scalar_select %p168, %s20, 2
          %s170 = scalar_lea.vmem %s2, %s169
        $region28: #{tpu_custom_call.1} parent=19 // pred_fallthru
          _
      $region20: #{tpu_custom_call.1} parent=5 // pred_fallthru
        _
      %p171 = scmp.le.s32.totalorder 1, %s12
      %p172 = scmp.lt.s32.totalorder %s12, 4
      %p173 = pnand %p171, %p172
      %p174 = pneg %p173
      // Predicated region
      $region29: #{tpu_custom_call.1} parent=5 // pred_check
        _
      $region30: #{tpu_custom_call.1} parent=5 // pred_check_branch
        %176 = sbr.rel (%p173) target = $region32
      $region31: #{tpu_custom_call.1} parent=5 // pred_region
        %s177 = ssub.s32 %s12, 1
        %s178 = smul.u32 7, %s21
        %p179 = scmp.lt.s32.totalorder %s178, 6
        %s180 = scalar_select %p179, %s178, 6
        %s181 = smul.addr %s180, 4
        %s182 = scalar_lea.vmem %s0, %s181
        %p183 = pneg %p50
        %p184 = pneg %p47
        %p185 = scmp.lt.s32.totalorder %s22, 2
        %s186 = scalar_select %p185, %s22, 2
        %s187 = smul.addr %s186, 4
        %s188 = scalar_lea.vmem %s1, %s187
        %p189 = pneg %p76
        %p190 = pneg %p73
        %p191 = scmp.lt.s32.totalorder %s22, 2
        %s192 = scalar_select %p191, %s22, 2
        %s193 = scalar_lea.vmem %s2, %s192
        %p194 = pneg %p102
        %p195 = pneg %p99
        %p196 = pneg %p130
        %p197 = pneg %p127
        %s198 = sand.u32 %s117, 1
        %s199 = scalar_lea.sflag [#allocation3], %s198
        %s200 = sand.u32 %s117, 1
        %s201 = smul.addr %s200, 56
        %s202 = scalar_lea.vmem [#allocation2], %s201
        %s203 = smul.u32 7, %s21
        %p204 = scmp.lt.s32.totalorder %s203, 6
        %s205 = scalar_select %p204, %s203, 6
        %s206 = smul.addr %s205, 4
        %s207 = scalar_lea.vmem %s0, %s206
        %s208 = smul.u32 7, %s21
        %p209 = scmp.lt.s32.totalorder %s22, 2
        %s210 = scalar_select %p209, %s22, 2
        %s211 = smul.addr %s210, 4
        %s212 = scalar_lea.vmem %s1, %s211
        %p213 = scmp.lt.s32.totalorder %s22, 2
        %s214 = scalar_select %p213, %s22, 2
        %s215 = scalar_lea.vmem %s2, %s214
        %s216 = smul.u32 7, %s21
        %v218 = vld [vmem:[%s207] sm:$0xf]
        %v219 = vld [vmem:[%s207 + $0x4] sm:$0xf]
        %v220 = vld [vmem:[%s207 + $0x8] sm:$0xf]
        %v221 = vld [vmem:[%s207 + $0xc] sm:$0xf]
        %v222 = vld [vmem:[%s207 + $0x10] sm:$0xf]
        %v223 = vld [vmem:[%s207 + $0x14] sm:$0xf]
        %v224 = vld [vmem:[%s207 + $0x18] sm:$0xf]
        %v225 = vld [vmem:[%s212] sm:$0xf]
        %v226 = vld [vmem:[%s215] sm:$0x1]
        %v228 = vlaneseq
        %v229 = vshrl.u32 %v228, 7
        %v230 = vsub.s32 0, %v229
        %v231 = vrot.slane %v226, %v230
        %v240 = vunpack.c.l.b16 %v218
        %v241 = vunpack.c.l.b16 %v219
        %v242 = vunpack.c.l.b16 %v220
        %v243 = vunpack.c.l.b16 %v221
        %v244 = vunpack.c.l.b16 %v222
        %v245 = vunpack.c.l.b16 %v223
        %v246 = vunpack.c.l.b16 %v224
        %v247 = vpack.c.b16 %v241, %v240
        %v248 = vpack.c.b16 %v243, %v242
        %v249 = vpack.c.b16 %v245, %v244
        %v250 = vpack.c.b16 %v246, %v246
        %vm251 = vcmask 64512
        %v253 = vsel %vm251, %v247, 0
        %v256 = vsel %vm251, %v248, 0
        %v259 = vsel %vm251, %v249, 0
        %v262 = vsel %vm251, %v250, 0
        %vm264 = vcmask 1043456
        %v266 = vsel %vm264, %v225, 0
        %268 = vmatprep.subr.bf16.mxu0 0
        %269 = vmatpush1.bf16.msra.mxu0 0
        %270 = vmatprep.subr.bf16.mxu0 0
        %271 = vmatpush1.bf16.msra.mxu0 0
        %272 = vmatprep.subr.bf16.mxu0 0
        %273 = vmatpush1.bf16.msra.mxu0 0
        %274 = vmatprep.subr.bf16.mxu0 0
        %275 = vmatpush1.bf16.msra.mxu0 0
        %276 = vmatprep.subr.bf16.mxu0 0
        %277 = vmatpush1.bf16.msra.mxu0 0
        %278 = vmatprep.subr.bf16.mxu0 0
        %279 = vmatpush1.bf16.msra.mxu0 0
        %280 = vmatprep.subr.bf16.mxu0 0
        %281 = vmatpush1.bf16.msra.mxu0 0
        %282 = vmatprep.subr.bf16.mxu0 0
        %283 = vmatpush1.bf16.msra.mxu0 %v266
        %284 = vmatprep.subr.bf16.mxu0 0
        %285 = vmatpush2.bf16.msra.mxu0 0
        %286 = vmatprep.subr.bf16.mxu0 0
        %287 = vmatpush2.bf16.msra.mxu0 0
        %288 = vmatprep.subr.bf16.mxu0 0
        %289 = vmatpush2.bf16.msra.mxu0 0
        %290 = vmatprep.subr.bf16.mxu0 0
        %291 = vmatpush2.bf16.msra.mxu0 0
        %292 = vmatprep.subr.bf16.mxu0 0
        %293 = vmatpush2.bf16.msra.mxu0 0
        %294 = vmatprep.subr.bf16.mxu0 0
        %295 = vmatpush2.bf16.msra.mxu0 0
        %296 = vmatprep.subr.bf16.mxu0 0
        %297 = vmatpush2.bf16.msra.mxu0 0
        %298 = vmatprep.subr.bf16.mxu0 0
        %299 = vmatpush2.bf16.msra.mxu0 0
        %300 = vmatprep.mubr.bf16.mxu0 0
        %301 = vmatmul.mubr.bf16.gmra.mxu0 %v253
        %v302 = vpop.f32.mrf.mxu0
        %v303 = vadd.f32 %v231, %v302
        %v304 = vpop.f32.mrf.mxu0
        %v305 = vpop.f32.mrf.mxu0
        %v306 = vadd.f32 %v231, %v305
        %v307 = vpop.f32.mrf.mxu0
        %308 = vmatprep.mubr.bf16.mxu0 0
        %309 = vmatmul.mubr.bf16.gmra.mxu0 %v256
        %v310 = vpop.f32.mrf.mxu0
        %v311 = vadd.f32 %v231, %v310
        %v312 = vpop.f32.mrf.mxu0
        %v313 = vpop.f32.mrf.mxu0
        %v314 = vadd.f32 %v231, %v313
        %v315 = vpop.f32.mrf.mxu0
        %316 = vmatprep.mubr.bf16.mxu0 0
        %317 = vmatmul.mubr.bf16.gmra.mxu0 %v259
        %v318 = vpop.f32.mrf.mxu0
        %v319 = vadd.f32 %v231, %v318
        %v320 = vpop.f32.mrf.mxu0
        %v321 = vpop.f32.mrf.mxu0
        %v322 = vadd.f32 %v231, %v321
        %v323 = vpop.f32.mrf.mxu0
        %324 = vmatprep.mubr.bf16.mxu0 0
        %325 = vmatmul.mubr.bf16.gmra.mxu0 %v262
        %v326 = vpop.f32.mrf.mxu0
        %v327 = vadd.f32 %v231, %v326
        %v328 = vpop.f32.mrf.mxu0
        %v329 = vpop.f32.mrf.mxu0
        %v330 = vpop.f32.mrf.mxu0
        %331 = vdwg.mxu0
        %332 = vst [vmem:[%s202] sm:$0xff] %v303
        %333 = vst [vmem:[%s202 + $0x8] sm:$0xff] %v306
        %334 = vst [vmem:[%s202 + $0x10] sm:$0xff] %v311
        %335 = vst [vmem:[%s202 + $0x18] sm:$0xff] %v314
        %336 = vst [vmem:[%s202 + $0x20] sm:$0xff] %v319
        %337 = vst [vmem:[%s202 + $0x28] sm:$0xff] %v322
        %338 = vst [vmem:[%s202 + $0x30] sm:$0xff] %v327
        %s339 = sand.u32 %s117, 1
        %s340 = scalar_lea.sflag [#allocation3], %s339
        %s341 = sand.u32 %s117, 1
        %s342 = smul.addr %s341, 56
        %s343 = scalar_lea.vmem [#allocation2], %s342
        // Predicated region
        $region33: #{tpu_custom_call.1} parent=31 // pred_check
          %p344 = pneg %p127
        $region34: #{tpu_custom_call.1} parent=31 // pred_check_branch
          %346 = sbr.rel (%p344) target = $region36
        $region35: #{tpu_custom_call.1} parent=31 // pred_region
          %s347 = smul.u32 7, %s21
          %s349 = ssub.s32 896, 896
          %350 = vsyncadd %s340, %s349
          %s351 = smul.addr %s347, 3
          %s352 = sadd.s32 %s22, %s351
          %s353 = smul.addr %s352, 128
          %s354 = scalar_lea.hbm %s3, %s353
          %s355 = sshll.u32 %s343, 4
          %s356 = int_to_ptr.vmem [resolvable:$true] %s355
          %361 = dma.vmem_to_hbm [thread:$0]  %s356, 896, %s354, %s340, 128, 384, 8
        $region36: #{tpu_custom_call.1} parent=31 // pred_fallthru
          _
      $region32: #{tpu_custom_call.1} parent=5 // pred_fallthru
        _
      %p362 = scmp.le.s32.totalorder 2, %s12
      // Predicated region
      $region37: #{tpu_custom_call.1} parent=5 // pred_check
        %p363 = pneg %p362
      $region38: #{tpu_custom_call.1} parent=5 // pred_check_branch
        %365 = sbr.rel (%p363) target = $region40
      $region39: #{tpu_custom_call.1} parent=5 // pred_region
        %s366 = ssub.s32 %s12, 2
        // Predicated region
        $region41: #{tpu_custom_call.1} parent=39 // pred_check
          %p367 = pneg %p133
        $region42: #{tpu_custom_call.1} parent=39 // pred_check_branch
          %369 = sbr.rel (%p367) target = $region44
        $region43: #{tpu_custom_call.1} parent=39 // pred_region
          %s370 = sand.u32 %s118, 1
          %s371 = scalar_lea.sflag [#allocation3], %s370
          %s372 = sand.u32 %s118, 1
          %s373 = smul.addr %s372, 56
          %s374 = scalar_lea.vmem [#allocation2], %s373
          %375 = dma.done %s371, 896
        $region44: #{tpu_custom_call.1} parent=39 // pred_fallthru
          _
      $region40: #{tpu_custom_call.1} parent=5 // pred_fallthru
        _
    $region6: #{tpu_custom_call.1} parent=1 // loop_footer
      %s16 = sadd.s32 1, %s12
    $region7: #{tpu_custom_call.1} parent=1 // loop_footer_branch
      %11 = sbr.rel target = $region3
    $region8: #{tpu_custom_call.1} parent=1 // loop_exit
      _
    %376 = vsyncpa [#allocation3], 1
    %s377 = scalar_lea.sflag [#allocation3], 1
    %378 = vsyncpa %s377, 1

</llo_original>
